<compile_context>
chip_gen: v5e
topology: v5e:2x2
jax: 0.10.0
libtpu: 0.0.40
codegen_flags: <defaults>
</compile_context>

<pallas_src>
import math
import numpy as np

import jax
import jax.numpy as jnp
from jax.experimental import pallas as pl
from jax.experimental.pallas import tpu as pltpu


def cosine_beta_schedule(timesteps, s=0.008):
    # Same math as the PyTorch version, done in float64 then cast to f32.
    steps = timesteps + 1
    x = np.linspace(0, timesteps, steps, dtype=np.float64)
    alphas_cumprod = np.cos((x / timesteps + s) / (1 + s) * math.pi * 0.5) ** 2
    alphas_cumprod = alphas_cumprod / alphas_cumprod[0]
    betas = 1 - alphas_cumprod[1:] / alphas_cumprod[:-1]
    return np.clip(betas, 0, 0.999)


def _pick_col_tile(L):
    """Largest lane-dense column tile that evenly divides L (512-1024 preferred)."""
    if L <= 2048:
        return L                      # single chunk; block == full array is always legal
    for cand in (2048, 1024, 512, 256, 128):
        if L % cand == 0:
            return cand
    return L                          # ragged fallback: one big block


def _p_losses_kernel(x_ref, noise_ref, coef_ref, w_ref, pvec_ref, out_ref):
    # x_ref / noise_ref : (C, Lt) lane-dense column chunk of the flattened batch.
    # coef_ref          : (5, Lt) per-column coefficients (see rows below).
    # w_ref             : (C, C) 1x1-conv weight, VMEM-resident across the grid.
    # pvec_ref          : (C, 2) [bias | time-embedding channel vector], resident.
    # out_ref           : (1, 1) accumulated weighted loss (constant block index).
    j = pl.program_id(0)

    @pl.when(j == 0)
    def _():
        out_ref[...] = jnp.zeros_like(out_ref)

    a2 = coef_ref[0:1, :]     # 2 * sqrt_alphas_cumprod[t_b]
    a  = coef_ref[1:2, :]     # sqrt_alphas_cumprod[t_b]
    bc = coef_ref[2:3, :]     # sqrt_one_minus_alphas_cumprod[t_b]
    wc = coef_ref[3:4, :]     # loss_weight[t_b] / (B*C*N)
    ts = coef_ref[4:5, :]     # time-embedding scale g(t_b)

    noise = noise_ref[...]
    # normalize folded into q_sample coefficients: a*(2*img - 1) + bc*noise
    x_t = a2 * x_ref[...] + bc * noise - a                     # (C, Lt)

    # Synthetic denoiser: 1x1 conv over channels + bias + rank-1 time embedding.
    C = x_t.shape[0]
    if C <= 8:
        # Tiny channel count: unrolled VPU FMAs; a CxCxLt dot would waste the MXU.
        Wv = w_ref[...]
        mo = Wv[:, 0:1] * x_t[0:1, :]
        for c in range(1, C):
            mo = mo + Wv[:, c:c + 1] * x_t[c:c + 1, :]
    else:
        mo = jnp.dot(w_ref[...], x_t, preferred_element_type=jnp.float32)

    bias = pvec_ref[:, 0:1]                                    # (C, 1)
    tvec = pvec_ref[:, 1:2]                                    # (C, 1)
    model_out = mo + bias + tvec * ts                          # (C, Lt)

    # objective == 'pred_noise' => target = noise; weighted MSE folded into wc.
    se = (model_out - noise) ** 2
    s = jnp.sum(se * wc, axis=1, keepdims=True)                # lane reduce   -> (C, 1)
    s = jnp.sum(s, axis=0, keepdims=True)                      # sublane reduce-> (1, 1)
    out_ref[...] += s


class GaussianDiffusion1DPallas:
    """objective='pred_noise', beta_schedule='cosine', auto_normalize=True,
    channel_first=True, self_condition=False."""

    def __init__(self, seq_length, channels, timesteps=100):
        self.seq_length = seq_length
        self.channels = channels
        self.num_timesteps = int(timesteps)

        betas = cosine_beta_schedule(timesteps)
        alphas = 1.0 - betas
        alphas_cumprod = np.cumprod(alphas)
        self.sqrt_alphas_cumprod = jnp.asarray(np.sqrt(alphas_cumprod), jnp.float32)
        self.sqrt_one_minus_alphas_cumprod = jnp.asarray(
            np.sqrt(1.0 - alphas_cumprod), jnp.float32)
        # pred_noise objective -> loss_weight = ones (kept explicit for parity)
        self.loss_weight = jnp.ones((timesteps,), jnp.float32)

        # TODO(synk): the real denoiser (Unet1D) is external to this module; a synthetic
        # deterministic 1x1-conv + rank-1 sinusoidal time-embedding stands in for it.
        kw, kb, kt = jax.random.split(jax.random.PRNGKey(42), 3)
        C = channels
        self.W = (jax.random.normal(kw, (C, C), jnp.float32) / math.sqrt(C))
        self.bias = 0.01 * jax.random.normal(kb, (C, 1), jnp.float32)
        self.tvec = 0.1 * jax.random.normal(kt, (C, 1), jnp.float32)
        # resident (C, 2) parameter block: [bias | time-embedding channel vector]
        self.pvec = jnp.concatenate([self.bias, self.tvec], axis=1)

    # ---- glue: random draws + coefficient gathers (the `extract` calls) ----
    def _draw(self, img, key):
        B, C, N = img.shape
        k_t, k_noise = jax.random.split(key)
        t = jax.random.randint(k_t, (B,), 0, self.num_timesteps)
        noise = jax.random.normal(k_noise, img.shape, jnp.float32)
        a = self.sqrt_alphas_cumprod[t]                          # (B,)
        bc = self.sqrt_one_minus_alphas_cumprod[t]               # (B,)
        lw = self.loss_weight[t]                                 # (B,)
        tscale = jnp.sin(t.astype(jnp.float32) * (math.pi / self.num_timesteps))  # (B,)
        return t, noise, a, bc, lw, tscale

    # ---- Pallas forward ----
    def forward(self, img, key):
        B, C, N = img.shape
        assert N == self.seq_length, f"seq length must be {self.seq_length}"
        assert C == self.channels
        _, noise, a, bc, lw, tscale = self._draw(img, key)

        # Layout plumbing (host-side glue): flatten batch into the lane axis.
        L = B * N
        x2 = jnp.transpose(img, (1, 0, 2)).reshape(C, L)
        n2 = jnp.transpose(noise, (1, 0, 2)).reshape(C, L)

        # Pack all per-batch coefficients into one lane-dense (5, L) array.
        rep = lambda v: jnp.repeat(v, N)                         # (B,) -> (L,)
        coef = jnp.stack(
            [rep(2.0 * a),                   # row 0: 2*sqrt_ac[t]
             rep(a),                         # row 1: sqrt_ac[t]
             rep(bc),                        # row 2: sqrt_1mac[t]
             rep(lw / float(B * C * N)),     # row 3: loss_weight[t]/(B*C*N)
             rep(tscale)],                   # row 4: time-embedding scale
            axis=0).astype(jnp.float32)

        Lt = _pick_col_tile(L)
        n_chunks = L // Lt
        # VMEM budget (per chunk, f32, double-buffered): 3 * 2 * (C+5) * Lt * 4 B
        # -> stays far under the 32 MiB scoped default (and v7x's 64 MiB physical)
        # for Lt <= 2048 at these channel counts, so no vmem_limit_bytes override.

        loss = pl.pallas_call(
            _p_losses_kernel,
            out_shape=jax.ShapeDtypeStruct((1, 1), jnp.float32),
            grid=(n_chunks,),
            in_specs=[
                pl.BlockSpec((C, Lt), lambda j: (0, j)),   # img (flattened)
                pl.BlockSpec((C, Lt), lambda j: (0, j)),   # noise (flattened)
                pl.BlockSpec((5, Lt), lambda j: (0, j)),   # per-column coefficients
                pl.BlockSpec((C, C), lambda j: (0, 0)),    # W (resident)
                pl.BlockSpec((C, 2), lambda j: (0, 0)),    # [bias | tvec] (resident)
            ],
            # Accumulated scalar output: constant block index -> VMEM-resident
            # across the (reduction) grid axis, single writeback at the end.
            out_specs=pl.BlockSpec((1, 1), lambda j: (0, 0)),
            compiler_params=pltpu.CompilerParams(
                dimension_semantics=("arbitrary",)),
        )(x2, n2, coef, self.W, self.pvec)

        return loss[0, 0]

    # ---- pure-JAX reference for validation ----
    def forward_reference(self, img, key):
        B, C, N = img.shape
        _, noise, a, bc, lw, tscale = self._draw(img, key)
        x0 = img * 2.0 - 1.0
        x_t = a[:, None, None] * x0 + bc[:, None, None] * noise
        model_out = (jnp.einsum('oc,bcn->bon', self.W, x_t)
                     + self.bias[None]
                     + self.tvec[None] * tscale[:, None, None])
        se = (model_out - noise) ** 2
        per_b = jnp.mean(se, axis=(1, 2)) * lw
        return jnp.mean(per_b)


if __name__ == "__main__":
    B, C, N = 2, 4, 16
    diff = GaussianDiffusion1DPallas(seq_length=N, channels=C, timesteps=100)

    key = jax.random.PRNGKey(0)
    k_img, k_fwd = jax.random.split(key)
    img = jax.random.uniform(k_img, (B, C, N), jnp.float32)   # "data" in [0, 1]

    loss = diff.forward(img, k_fwd)
    loss = jax.block_until_ready(loss)

    ref = jax.block_until_ready(diff.forward_reference(img, k_fwd))
    assert jnp.isfinite(loss)
    assert jnp.allclose(loss, ref, rtol=1e-3, atol=1e-3), (loss, ref)

    print("KERNEL_OK")
</pallas_src>

<mosaic_0001>
module attributes {stable_mosaic.version = 11 : i64} {
  func.func @_p_losses_kernel(%arg0: i32, %arg1: memref<4x32xf32, #tpu.memory_space<vmem>>, %arg2: memref<4x32xf32, #tpu.memory_space<vmem>>, %arg3: memref<5x32xf32, #tpu.memory_space<vmem>>, %arg4: memref<4x4xf32, #tpu.memory_space<vmem>>, %arg5: memref<4x2xf32, #tpu.memory_space<vmem>>, %arg6: memref<1x1xf32, #tpu.memory_space<vmem>>) attributes {dimension_semantics = [#tpu.dimension_semantics<arbitrary>], iteration_bounds = array<i64: 1>, scalar_prefetch = 0 : i64, scratch_operands = 0 : i64, tpu.core_type = #tpu.core_type<tc>, window_params = [{transform_indices = @transform_0, window_bounds = array<i64: 4, 32>}, {transform_indices = @transform_1, window_bounds = array<i64: 4, 32>}, {transform_indices = @transform_2, window_bounds = array<i64: 5, 32>}, {pipeline_mode = #tpu.pipeline_mode<synchronous>, transform_indices = @transform_3, window_bounds = array<i64: 4, 4>}, {pipeline_mode = #tpu.pipeline_mode<synchronous>, transform_indices = @transform_4, window_bounds = array<i64: 4, 2>}, {pipeline_mode = #tpu.pipeline_mode<synchronous>, transform_indices = @transform_5, window_bounds = array<i64: 1, 1>}]} {
    %c0_i32 = arith.constant 0 : i32
    %0 = arith.cmpi eq, %arg0, %c0_i32 : i32
    %1 = arith.extui %0 : i1 to i32
    %c0_i32_0 = arith.constant 0 : i32
    %2 = arith.cmpi ne, %1, %c0_i32_0 : i32
    scf.if %2 {
      %cst_21 = arith.constant 0.000000e+00 : f32
      %60 = vector.broadcast %cst_21 : f32 to vector<1x1xf32>
      %c0_22 = arith.constant 0 : index
      %c0_23 = arith.constant 0 : index
      %61 = vector.load %arg6[%c0_22, %c0_23] : memref<1x1xf32, #tpu.memory_space<vmem>>, vector<1x1xf32>
      tpu.vector_store %arg6[%c0_22, %c0_23], %60 {strides = array<i32>} : memref<1x1xf32, #tpu.memory_space<vmem>>, vector<1x1xf32>,
    } else {
    }
    %c0 = arith.constant 0 : index
    %c0_1 = arith.constant 0 : index
    %3 = vector.load %arg3[%c0, %c0_1] : memref<5x32xf32, #tpu.memory_space<vmem>>, vector<1x32xf32>
    %c1 = arith.constant 1 : index
    %c0_2 = arith.constant 0 : index
    %4 = vector.load %arg3[%c1, %c0_2] : memref<5x32xf32, #tpu.memory_space<vmem>>, vector<1x32xf32>
    %c2 = arith.constant 2 : index
    %c0_3 = arith.constant 0 : index
    %5 = vector.load %arg3[%c2, %c0_3] : memref<5x32xf32, #tpu.memory_space<vmem>>, vector<1x32xf32>
    %c3 = arith.constant 3 : index
    %c0_4 = arith.constant 0 : index
    %6 = vector.load %arg3[%c3, %c0_4] : memref<5x32xf32, #tpu.memory_space<vmem>>, vector<1x32xf32>
    %c4 = arith.constant 4 : index
    %c0_5 = arith.constant 0 : index
    %7 = vector.load %arg3[%c4, %c0_5] : memref<5x32xf32, #tpu.memory_space<vmem>>, vector<1x32xf32>
    %c0_6 = arith.constant 0 : index
    %c0_7 = arith.constant 0 : index
    %8 = vector.load %arg2[%c0_6, %c0_7] : memref<4x32xf32, #tpu.memory_space<vmem>>, vector<4x32xf32>
    %c0_8 = arith.constant 0 : index
    %c0_9 = arith.constant 0 : index
    %9 = vector.load %arg1[%c0_8, %c0_9] : memref<4x32xf32, #tpu.memory_space<vmem>>, vector<4x32xf32>
    %10 = vector.broadcast %3 : vector<1x32xf32> to vector<4x32xf32>
    %11 = arith.mulf %10, %9 : vector<4x32xf32>
    %12 = vector.broadcast %5 : vector<1x32xf32> to vector<4x32xf32>
    %13 = arith.mulf %12, %8 : vector<4x32xf32>
    %14 = arith.addf %11, %13 : vector<4x32xf32>
    %15 = vector.broadcast %4 : vector<1x32xf32> to vector<4x32xf32>
    %16 = arith.subf %14, %15 : vector<4x32xf32>
    %c0_10 = arith.constant 0 : index
    %c0_11 = arith.constant 0 : index
    %17 = vector.load %arg4[%c0_10, %c0_11] : memref<4x4xf32, #tpu.memory_space<vmem>>, vector<4x4xf32>
    %18 = vector.extract_strided_slice %17 {offsets = [0, 0], sizes = [4, 1], strides = [1, 1]} : vector<4x4xf32> to vector<4x1xf32>
    %19 = vector.extract_strided_slice %16 {offsets = [0, 0], sizes = [1, 32], strides = [1, 1]} : vector<4x32xf32> to vector<1x32xf32>
    %20 = vector.broadcast %18 : vector<4x1xf32> to vector<4x32xf32>
    %21 = vector.broadcast %19 : vector<1x32xf32> to vector<4x32xf32>
    %22 = arith.mulf %20, %21 : vector<4x32xf32>
    %23 = vector.extract_strided_slice %17 {offsets = [0, 1], sizes = [4, 1], strides = [1, 1]} : vector<4x4xf32> to vector<4x1xf32>
    %24 = vector.extract_strided_slice %16 {offsets = [1, 0], sizes = [1, 32], strides = [1, 1]} : vector<4x32xf32> to vector<1x32xf32>
    %25 = vector.broadcast %23 : vector<4x1xf32> to vector<4x32xf32>
    %26 = vector.broadcast %24 : vector<1x32xf32> to vector<4x32xf32>
    %27 = arith.mulf %25, %26 : vector<4x32xf32>
    %28 = arith.addf %22, %27 : vector<4x32xf32>
    %29 = vector.extract_strided_slice %17 {offsets = [0, 2], sizes = [4, 1], strides = [1, 1]} : vector<4x4xf32> to vector<4x1xf32>
    %30 = vector.extract_strided_slice %16 {offsets = [2, 0], sizes = [1, 32], strides = [1, 1]} : vector<4x32xf32> to vector<1x32xf32>
    %31 = vector.broadcast %29 : vector<4x1xf32> to vector<4x32xf32>
    %32 = vector.broadcast %30 : vector<1x32xf32> to vector<4x32xf32>
    %33 = arith.mulf %31, %32 : vector<4x32xf32>
    %34 = arith.addf %28, %33 : vector<4x32xf32>
    %35 = vector.extract_strided_slice %17 {offsets = [0, 3], sizes = [4, 1], strides = [1, 1]} : vector<4x4xf32> to vector<4x1xf32>
    %36 = vector.extract_strided_slice %16 {offsets = [3, 0], sizes = [1, 32], strides = [1, 1]} : vector<4x32xf32> to vector<1x32xf32>
    %37 = vector.broadcast %35 : vector<4x1xf32> to vector<4x32xf32>
    %38 = vector.broadcast %36 : vector<1x32xf32> to vector<4x32xf32>
    %39 = arith.mulf %37, %38 : vector<4x32xf32>
    %40 = arith.addf %34, %39 : vector<4x32xf32>
    %c0_12 = arith.constant 0 : index
    %c0_13 = arith.constant 0 : index
    %41 = vector.load %arg5[%c0_12, %c0_13] : memref<4x2xf32, #tpu.memory_space<vmem>>, vector<4x1xf32>
    %c0_14 = arith.constant 0 : index
    %c1_15 = arith.constant 1 : index
    %42 = vector.load %arg5[%c0_14, %c1_15] : memref<4x2xf32, #tpu.memory_space<vmem>>, vector<4x1xf32>
    %43 = vector.broadcast %41 : vector<4x1xf32> to vector<4x32xf32>
    %44 = arith.addf %40, %43 : vector<4x32xf32>
    %45 = vector.broadcast %42 : vector<4x1xf32> to vector<4x32xf32>
    %46 = vector.broadcast %7 : vector<1x32xf32> to vector<4x32xf32>
    %47 = arith.mulf %45, %46 : vector<4x32xf32>
    %48 = arith.addf %44, %47 : vector<4x32xf32>
    %49 = arith.subf %48, %8 : vector<4x32xf32>
    %50 = arith.mulf %49, %49 : vector<4x32xf32>
    %51 = vector.broadcast %6 : vector<1x32xf32> to vector<4x32xf32>
    %52 = arith.mulf %50, %51 : vector<4x32xf32>
    %cst = arith.constant dense<0.000000e+00> : vector<4xf32>
    %53 = vector.multi_reduction <add>, %52, %cst [1] : vector<4x32xf32> to vector<4xf32>
    %54 = vector.shape_cast %53 : vector<4xf32> to vector<4x1xf32>
    %cst_16 = arith.constant dense<0.000000e+00> : vector<1xf32>
    %55 = vector.multi_reduction <add>, %54, %cst_16 [0] : vector<4x1xf32> to vector<1xf32>
    %56 = vector.shape_cast %55 : vector<1xf32> to vector<1x1xf32>
    %c0_17 = arith.constant 0 : index
    %c0_18 = arith.constant 0 : index
    %57 = vector.load %arg6[%c0_17, %c0_18] : memref<1x1xf32, #tpu.memory_space<vmem>>, vector<1x1xf32>
    %58 = arith.addf %57, %56 : vector<1x1xf32>
    %c0_19 = arith.constant 0 : index
    %c0_20 = arith.constant 0 : index
    %59 = vector.load %arg6[%c0_19, %c0_20] : memref<1x1xf32, #tpu.memory_space<vmem>>, vector<1x1xf32>
    tpu.vector_store %arg6[%c0_19, %c0_20], %58 {strides = array<i32>} : memref<1x1xf32, #tpu.memory_space<vmem>>, vector<1x1xf32>,
    return
  }
  func.func @transform_0(%arg0: i32) -> (i32, i32) {
    %c0_i32 = arith.constant 0 : i32
    %c0_i32_0 = arith.constant 0 : i32
    return %c0_i32, %arg0 : i32, i32
  }
  func.func @transform_1(%arg0: i32) -> (i32, i32) {
    %c0_i32 = arith.constant 0 : i32
    %c0_i32_0 = arith.constant 0 : i32
    return %c0_i32, %arg0 : i32, i32
  }
  func.func @transform_2(%arg0: i32) -> (i32, i32) {
    %c0_i32 = arith.constant 0 : i32
    %c0_i32_0 = arith.constant 0 : i32
    return %c0_i32, %arg0 : i32, i32
  }
  func.func @transform_3(%arg0: i32) -> (i32, i32) {
    %c0_i32 = arith.constant 0 : i32
    %c0_i32_0 = arith.constant 0 : i32
    %c0_i32_1 = arith.constant 0 : i32
    return %c0_i32, %c0_i32_0 : i32, i32
  }
  func.func @transform_4(%arg0: i32) -> (i32, i32) {
    %c0_i32 = arith.constant 0 : i32
    %c0_i32_0 = arith.constant 0 : i32
    %c0_i32_1 = arith.constant 0 : i32
    return %c0_i32, %c0_i32_0 : i32, i32
  }
  func.func @transform_5(%arg0: i32) -> (i32, i32) {
    %c0_i32 = arith.constant 0 : i32
    %c0_i32_0 = arith.constant 0 : i32
    %c0_i32_1 = arith.constant 0 : i32
    return %c0_i32, %c0_i32_0 : i32, i32
  }
}

</mosaic_0001>

<llo_original>
// kernel: tpu_custom_call.1
$region0: #{tpu_custom_call.1}
  #allocation0 [shape = 'u32[]', space=smem, size = 0x4, offset = 0x4, fixed_abs, tag = 'smem constant byte address 0x4 - core index']
  #allocation1 [shape = 'u32[72,128]{1,0:T(1,128)}', space=vmem, size = 0x9000, scoped, tag = 'internal scratch']
  %s0 = inlined_call_operand.vmem [shape: f32[4,32], index: 0, kind: input, shape index: {}]
  %s1 = inlined_call_operand.hbm [shape: f32[4,32], index: 1, kind: input, shape index: {}]
  %s2 = inlined_call_operand.hbm [shape: f32[5,32], index: 2, kind: input, shape index: {}]
  %s3 = inlined_call_operand.hbm [shape: f32[4,4], index: 3, kind: input, shape index: {}]
  %s4 = inlined_call_operand.vmem [shape: f32[4,2], index: 4, kind: input, shape index: {}]
  %s5 = inlined_call_operand.hbm [shape: f32[1,1], index: 5, kind: output, shape index: {}]
  %s6 = sld [smem:[#allocation0]]
  $region46: #{tpu_custom_call.1} parent=0
    _
  %s8 = ssub.s32 1, %s6
  %s9 = scalar_select 0, %s8, %s6
  $region1: #{tpu_custom_call.1} parent=0
    #allocation2 [shape = 'u8[2048]{0}', space=vmem, size = 0x800, scoped, tag = 'input window, operand 1, single buffered']
    #allocation3 [shape = 's32[1]{0}', space=sflag, size = 0x4, scoped, tag = 'scoped memory for tpu_custom_call.1']
    #allocation4 [shape = 's32[1]{0}', space=sflag, size = 0x4, scoped, tag = 'scoped memory for tpu_custom_call.1']
    #allocation5 [shape = 'u8[4096]{0}', space=vmem, size = 0x1000, scoped, tag = 'input window, operand 2, single buffered']
    #allocation6 [shape = 's32[1]{0}', space=sflag, size = 0x4, scoped, tag = 'scoped memory for tpu_custom_call.1']
    #allocation7 [shape = 'u8[2048]{0}', space=vmem, size = 0x800, scoped, tag = 'input window, operand 3, single buffered']
    #allocation8 [shape = 'u8[512]{0}', space=vmem, size = 0x400, scoped, tag = 'output window, operand 0, single buffered']
    %10 = vsyncpa [#allocation3], 0
    %11 = vsyncpa [#allocation6], 0
    %12 = vsyncpa [#allocation4], 0
    // Predicated region
    $region2: #{tpu_custom_call.1} parent=1 // pred_check
      _
    $region3: #{tpu_custom_call.1} parent=1 // pred_check_branch
      %14 = sbr.rel (0) target = $region5
    $region4: #{tpu_custom_call.1} parent=1 // pred_region
      _
    $region5: #{tpu_custom_call.1} parent=1 // pred_fallthru
      _
    // Predicated region
    $region6: #{tpu_custom_call.1} parent=1 // pred_check
      _
    $region7: #{tpu_custom_call.1} parent=1 // pred_check_branch
      %16 = sbr.rel (0) target = $region9
    $region8: #{tpu_custom_call.1} parent=1 // pred_region
      %18 = vsyncadd [#allocation3], 0
      %s20 = sshll.u32 %s1, 4
      %s21 = int_to_ptr.hbm [resolvable:$true] %s20
      %s22 = sshll.u32 [#allocation2], 4
      %s23 = int_to_ptr.vmem [resolvable:$true] %s22
      %25 = dma.hbm_to_vmem [thread:$0]  %s21, 64, %s23, [#allocation3]
    $region9: #{tpu_custom_call.1} parent=1 // pred_fallthru
      _
    // Predicated region
    $region10: #{tpu_custom_call.1} parent=1 // pred_check
      _
    $region11: #{tpu_custom_call.1} parent=1 // pred_check_branch
      %27 = sbr.rel (0) target = $region13
    $region12: #{tpu_custom_call.1} parent=1 // pred_region
      %29 = vsyncadd [#allocation6], 0
      %s31 = sshll.u32 %s2, 4
      %s32 = int_to_ptr.hbm [resolvable:$true] %s31
      %s33 = sshll.u32 [#allocation5], 4
      %s34 = int_to_ptr.vmem [resolvable:$true] %s33
      %36 = dma.hbm_to_vmem [thread:$0]  %s32, 128, %s34, [#allocation6]
    $region13: #{tpu_custom_call.1} parent=1 // pred_fallthru
      _
    // Predicated region
    $region14: #{tpu_custom_call.1} parent=1 // pred_check
      _
    $region15: #{tpu_custom_call.1} parent=1 // pred_check_branch
      %38 = sbr.rel (0) target = $region17
    $region16: #{tpu_custom_call.1} parent=1 // pred_region
      %40 = vsyncadd [#allocation6], 0
      %s42 = sshll.u32 %s3, 4
      %s43 = int_to_ptr.hbm [resolvable:$true] %s42
      %s44 = sshll.u32 [#allocation7], 4
      %s45 = int_to_ptr.vmem [resolvable:$true] %s44
      %47 = dma.hbm_to_vmem [thread:$0]  %s43, 64, %s45, [#allocation6]
    $region17: #{tpu_custom_call.1} parent=1 // pred_fallthru
      _
    // Predicated region
    $region18: #{tpu_custom_call.1} parent=1 // pred_check
      _
    $region19: #{tpu_custom_call.1} parent=1 // pred_check_branch
      %49 = sbr.rel (0) target = $region21
    $region20: #{tpu_custom_call.1} parent=1 // pred_region
      _
    $region21: #{tpu_custom_call.1} parent=1 // pred_fallthru
      _
    // Predicated region
    $region22: #{tpu_custom_call.1} parent=1 // pred_check
      _
    $region23: #{tpu_custom_call.1} parent=1 // pred_check_branch
      %51 = sbr.rel (0) target = $region25
    $region24: #{tpu_custom_call.1} parent=1 // pred_region
      %53 = dma.done [#allocation3], 64
    $region25: #{tpu_custom_call.1} parent=1 // pred_fallthru
      _
    // Predicated region
    $region26: #{tpu_custom_call.1} parent=1 // pred_check
      _
    $region27: #{tpu_custom_call.1} parent=1 // pred_check_branch
      %55 = sbr.rel (0) target = $region29
    $region28: #{tpu_custom_call.1} parent=1 // pred_region
      %57 = dma.done [#allocation6], 128
    $region29: #{tpu_custom_call.1} parent=1 // pred_fallthru
      _
    // Predicated region
    $region30: #{tpu_custom_call.1} parent=1 // pred_check
      _
    $region31: #{tpu_custom_call.1} parent=1 // pred_check_branch
      %59 = sbr.rel (0) target = $region33
    $region32: #{tpu_custom_call.1} parent=1 // pred_region
      %61 = dma.done [#allocation6], 64
    $region33: #{tpu_custom_call.1} parent=1 // pred_fallthru
      _
    %p62 = scmp.eq.s32.totalorder 0, 0
    // Predicated region
    $region34: #{tpu_custom_call.1} parent=1 // pred_check
      %p63 = pneg %p62
    $region35: #{tpu_custom_call.1} parent=1 // pred_check_branch
      %65 = sbr.rel (%p63) target = $region37
    $region36: #{tpu_custom_call.1} parent=1 // pred_region
      %vm66 = vcmask 0
      %67 = vst.msk [vmem:[#allocation8] sm:$0x1] %vm66, 0.0
    $region37: #{tpu_custom_call.1} parent=1 // pred_fallthru
      _
    %v68 = vld [vmem:[#allocation5] sm:$0x1]
    %v69 = vld [vmem:[#allocation5 + $0x1] sm:$0x1]
    %v70 = vld [vmem:[#allocation5 + $0x2] sm:$0x1]
    %v71 = vld [vmem:[#allocation5 + $0x3] sm:$0x1]
    %v72 = vld [vmem:[#allocation5 + $0x4] sm:$0x1]
    %v73 = vld [vmem:[#allocation2] sm:$0xf]
    %v74 = vld [vmem:[%s0] sm:$0xf]
    %v75 = vperm.slane %v68, 0
    %v76 = vmul.f32 %v75, %v74
    %v77 = vperm.slane %v70, 0
    %v78 = vmul.f32 %v77, %v73
    %v79 = vadd.f32 %v76, %v78
    %v80 = vperm.slane %v69, 0
    %v81 = vsub.f32 %v79, %v80
    %v82 = vld [vmem:[#allocation7] sm:$0xf]
    %84 = vset.pattern.permute.xlu0 0
    %85 = vperm.xlu0 %84, %v82
    %v86 = vpop.permute.xlu0 %85
    %v88 = vperm.slane %v81, 0
    %v89 = vmul.f32 %v86, %v88
    %90 = vset.pattern.permute.xlu0 1
    %91 = vperm.xlu0 %90, %v82
    %v92 = vpop.permute.xlu0 %91
    %v94 = vperm.slane %v81, 1
    %v95 = vmul.f32 %v92, %v94
    %v96 = vadd.f32 %v89, %v95
    %97 = vset.pattern.permute.xlu0 2
    %98 = vperm.xlu0 %97, %v82
    %v99 = vpop.permute.xlu0 %98
    %v101 = vperm.slane %v81, 2
    %v102 = vmul.f32 %v99, %v101
    %v103 = vadd.f32 %v96, %v102
    %104 = vset.pattern.permute.xlu0 3
    %105 = vperm.xlu0 %104, %v82
    %v106 = vpop.permute.xlu0 %105
    %v108 = vperm.slane %v81, 3
    %v109 = vmul.f32 %v106, %v108
    %v110 = vadd.f32 %v103, %v109
    %v111 = vld [vmem:[%s4] sm:$0xf]
    %113 = vset.pattern.permute.xlu0 0
    %114 = vperm.xlu0 %113, %v111
    %v115 = vpop.permute.xlu0 %114
    %v117 = vadd.f32 %v110, %v115
    %118 = vset.pattern.permute.xlu0 1
    %119 = vperm.xlu0 %118, %v111
    %v120 = vpop.permute.xlu0 %119
    %v122 = vperm.slane %v72, 0
    %v123 = vmul.f32 %v120, %v122
    %v124 = vadd.f32 %v117, %v123
    %v125 = vsub.f32 %v124, %v73
    %v126 = vmul.f32 %v125, %v125
    %v127 = vperm.slane %v71, 0
    %v128 = vmul.f32 %v126, %v127
    %vm129 = vcmask 257024
    %v130 = vsel %vm129, %v128, 0.0
    %131 = vadd.xlane.f32.xlu0 %v130
    %v132 = vpop.xlane.xlu0 %131
    %vm133 = vcmask 1043456
    %v134 = vsel %vm133, %v132, 0.0
    %v135 = vrot.slane %v134, 4
    %v136 = vadd.f32 %v134, %v135
    %v137 = vrot.slane %v136, 2
    %v138 = vadd.f32 %v136, %v137
    %v139 = vrot.slane %v138, 1
    %v140 = vadd.f32 %v138, %v139
    %v141 = vld [vmem:[#allocation8] sm:$0x1]
    %v142 = vadd.f32 %v141, %v140
    %vm143 = vcmask 0
    %144 = vst.msk [vmem:[#allocation8] sm:$0x1] %vm143, %v142
    // Predicated region
    $region38: #{tpu_custom_call.1} parent=1 // pred_check
      _
    $region39: #{tpu_custom_call.1} parent=1 // pred_check_branch
      %146 = sbr.rel (0) target = $region41
    $region40: #{tpu_custom_call.1} parent=1 // pred_region
      %148 = vsyncadd [#allocation4], 0
      %s150 = sshll.u32 [#allocation8], 4
      %s151 = int_to_ptr.vmem [resolvable:$true] %s150
      %s152 = sshll.u32 %s5, 4
      %s153 = int_to_ptr.hbm [resolvable:$true] %s152
      %155 = dma.vmem_to_hbm [thread:$0]  %s151, 16, %s153, [#allocation4]
    $region41: #{tpu_custom_call.1} parent=1 // pred_fallthru
      _
    // Predicated region
    $region42: #{tpu_custom_call.1} parent=1 // pred_check
      _
    $region43: #{tpu_custom_call.1} parent=1 // pred_check_branch
      %157 = sbr.rel (0) target = $region45
    $region44: #{tpu_custom_call.1} parent=1 // pred_region
      %159 = dma.done [#allocation4], 16
    $region45: #{tpu_custom_call.1} parent=1 // pred_fallthru
      _
    %160 = vsyncpa [#allocation3], 1
    %161 = vsyncpa [#allocation6], 1
    %162 = vsyncpa [#allocation4], 1

</llo_original>
